<compile_context>
chip_gen: v5e
topology: v5e:2x2
jax: 0.10.0
libtpu: 0.0.40
codegen_flags: <defaults>
</compile_context>

<pallas_src>
import functools

import jax
import jax.numpy as jnp
from jax.experimental import pallas as pl
from jax.experimental.pallas import tpu as pltpu

_LANES = 128
_TARGET_BLOCK_BYTES = 4 * 1024 * 1024   # ~4 MiB per block (amortizes ~0.35us/step)
_VMEM_LIMIT_BYTES = 32 * 1024 * 1024    # 2x-in + 2x-out 4 MiB buffers + headroom
_MIN_PALLAS_BYTES = 4 * 1024 * 1024     # below this, fused jnp beats a kernel launch
_MIN_PALLAS_ROWS = 64                   # rows-per-sample threshold for the kernel


def _round_up(v, m):
    return (v + m - 1) // m * m


def _drop_path_kernel(keep_ref, x_ref, o_ref, *, inv_keep_prob):
    # keep_ref: (B,) int32 in SMEM (scalar prefetch) -- 1 = keep, 0 = drop.
    b = pl.program_id(0)
    keep_b = keep_ref[b]

    @pl.when(keep_b == 0)
    def _():
        # Dropped sample: write zeros; its input block was never fetched
        # (the input index_map points it at block (0,0,0)).
        o_ref[...] = jnp.zeros_like(o_ref)

    @pl.when(keep_b != 0)
    def _():
        # In-dtype multiply by the compile-time constant 1/keep_prob.
        o_ref[...] = x_ref[...] * jnp.asarray(inv_keep_prob, dtype=x_ref.dtype)


def _x_index_map(b, r, keep_ref):
    # Dropped samples (keep == 0) map every row-block to block (0, 0, 0):
    # consecutive identical block indices make Pallas skip the input DMA.
    k = keep_ref[b]
    return (b * k, r * k, 0)


def _out_index_map(b, r, keep_ref):
    del keep_ref
    return (b, r, 0)


def drop_path(x, drop_prob, rng, *, training=True, force_pallas=False):
    """Pallas DropPath. x: (B, ...) array; drops whole samples.

    `rng` may be an int seed or a jax.random key.
    """
    if drop_prob is None or drop_prob == 0.0 or not training:
        return x
    keep_prob = 1.0 - drop_prob

    orig_shape = x.shape
    B = int(orig_shape[0])
    N = 1
    for d in orig_shape[1:]:
        N *= int(d)

    # Per-sample Bernoulli(keep_prob) mask, exactly like torch:
    #   floor(keep_prob + U[0,1)) in {0, 1}
    key = rng if isinstance(rng, jax.Array) else jax.random.PRNGKey(int(rng))
    u = jax.random.uniform(key, (B,), dtype=jnp.float32)
    keep = jnp.floor(jnp.float32(keep_prob) + u).astype(jnp.int32)  # (B,)

    dsize = x.dtype.itemsize
    rows = pl.cdiv(N, _LANES)

    # Small-problem fallback: let XLA's fused elementwise handle it.
    if not force_pallas and (B * N * dsize < _MIN_PALLAS_BYTES
                             or rows < _MIN_PALLAS_ROWS
                             or x.ndim < 2):
        scale = keep.astype(x.dtype) * jnp.asarray(1.0 / keep_prob, dtype=x.dtype)
        return x * scale.reshape((B,) + (1,) * (x.ndim - 1))

    # Lane-dense layout: (B, rows, 128). Pad only if N is not a multiple of 128.
    n_rounded = rows * _LANES
    x2 = x.reshape(B, N)
    if n_rounded != N:
        x2 = jnp.pad(x2, ((0, 0), (0, n_rounded - N)))
    x3 = x2.reshape(B, rows, _LANES)

    # Block size chosen by bytes (~4 MiB), rows per block a multiple of 8
    # (or the full row extent for a single block per sample).
    target_rows = max(8, (_TARGET_BLOCK_BYTES // (_LANES * dsize)) // 8 * 8)
    if rows <= target_rows:
        tile_rows = rows            # full-extent block: no 8-multiple requirement
    else:
        tile_rows = target_rows     # multiple of 8; ragged last block masked by Pallas

    # v7x megacore: if B == 1, split the row axis so both TensorCores get work.
    if B == 1 and rows >= 16 and pl.cdiv(rows, tile_rows) < 2:
        tile_rows = _round_up(pl.cdiv(rows, 2), 8)

    grid_r = pl.cdiv(rows, tile_rows)

    kernel = functools.partial(_drop_path_kernel,
                               inv_keep_prob=float(1.0 / keep_prob))

    out3 = pl.pallas_call(
        kernel,
        out_shape=jax.ShapeDtypeStruct((B, rows, _LANES), x.dtype),
        grid_spec=pltpu.PrefetchScalarGridSpec(
            num_scalar_prefetch=1,
            grid=(B, grid_r),
            # index_maps receive the scalar-prefetch keep ref positionally.
            in_specs=[pl.BlockSpec((1, tile_rows, _LANES), _x_index_map)],
            out_specs=pl.BlockSpec((1, tile_rows, _LANES), _out_index_map),
        ),
        compiler_params=pltpu.CompilerParams(
            # Mask is precomputed -> every grid step is independent; let
            # v7x's two TensorCores split the batch/row grid.
            dimension_semantics=("parallel", "parallel"),
            vmem_limit_bytes=_VMEM_LIMIT_BYTES,
        ),
    )(keep, x3)

    out2 = out3.reshape(B, n_rounded)
    if n_rounded != N:
        out2 = out2[:, :N]
    return out2.reshape(orig_shape)


if __name__ == "__main__":
    key = jax.random.PRNGKey(0)
    drop_prob = 0.25
    keep_prob = 1.0 - drop_prob

    def check(out, x, kp):
        good = out.shape == x.shape and out.dtype == x.dtype
        for b in range(x.shape[0]):
            zero = bool(jnp.all(out[b] == 0.0))
            scaled = bool(jnp.allclose(out[b], x[b] / kp, atol=1e-5, rtol=1e-5))
            good = good and (zero or scaled)
        return good

    ok = True

    # Module-consistent small shape: (B, C, H, W) = (2, 4, 16, 16).
    B, C, H, W = 2, 4, 16, 16
    x = jax.random.normal(key, (B, C, H, W), dtype=jnp.float32)

    # 1) Pallas kernel path, lane-aligned (N = 1024 -> no pad, no slice).
    out = jax.block_until_ready(
        drop_path(x, drop_prob, jax.random.PRNGKey(123), training=True,
                  force_pallas=True))
    ok = ok and check(out, x, keep_prob)

    # 2) Pallas kernel path, unaligned trailing dims (pads once, slices once).
    x_odd = jax.random.normal(jax.random.PRNGKey(1), (3, 5, 7, 9),
                              dtype=jnp.float32)
    out_odd = jax.block_until_ready(
        drop_path(x_odd, drop_prob, jax.random.PRNGKey(7), training=True,
                  force_pallas=True))
    ok = ok and check(out_odd, x_odd, keep_prob)

    # 3) Small-problem fallback (plain fused jnp), int seed.
    out_fb = jax.block_until_ready(drop_path(x, drop_prob, 123, training=True))
    ok = ok and check(out_fb, x, keep_prob)

    # 4) Identity paths: eval mode and drop_prob == 0.
    ok = ok and bool(jnp.all(drop_path(x, drop_prob, 123, training=False) == x))
    ok = ok and bool(jnp.all(drop_path(x, 0.0, 123, training=True) == x))

    if ok:
        print("KERNEL_OK")
    else:
        raise SystemExit("mismatch in DropPath kernel output")
</pallas_src>

<mosaic_0001>
module attributes {stable_mosaic.version = 11 : i64} {
  func.func @_drop_path_kernel(%arg0: i32, %arg1: i32, %arg2: memref<2xi32, #tpu.memory_space<smem>>, %arg3: memref<1x8x128xf32, #tpu.memory_space<vmem>>, %arg4: memref<1x8x128xf32, #tpu.memory_space<vmem>>) attributes {dimension_semantics = [#tpu.dimension_semantics<parallel>, #tpu.dimension_semantics<parallel>], iteration_bounds = array<i64: 2, 1>, scalar_prefetch = 1 : i64, scratch_operands = 0 : i64, tpu.core_type = #tpu.core_type<tc>, window_params = [{transform_indices = @transform_0, window_bounds = array<i64: 1, 8, 128>}, {transform_indices = @transform_1, window_bounds = array<i64: 1, 8, 128>}]} {
    %0 = arith.index_cast %arg0 : i32 to index
    %1 = memref.load %arg2[%0] : memref<2xi32, #tpu.memory_space<smem>>
    %c0_i32 = arith.constant 0 : i32
    %2 = arith.cmpi eq, %1, %c0_i32 : i32
    %3 = arith.extui %2 : i1 to i32
    %c0_i32_0 = arith.constant 0 : i32
    %4 = arith.cmpi ne, %3, %c0_i32_0 : i32
    scf.if %4 {
      %cst = arith.constant 0.000000e+00 : f32
      %8 = vector.broadcast %cst : f32 to vector<1x8x128xf32>
      %c0 = arith.constant 0 : index
      %c0_3 = arith.constant 0 : index
      %c0_4 = arith.constant 0 : index
      %9 = vector.load %arg4[%c0, %c0_3, %c0_4] : memref<1x8x128xf32, #tpu.memory_space<vmem>>, vector<1x8x128xf32>
      tpu.vector_store %arg4[%c0, %c0_3, %c0_4], %8 {strides = array<i32>} : memref<1x8x128xf32, #tpu.memory_space<vmem>>, vector<1x8x128xf32>,
    } else {
    }
    %c0_i32_1 = arith.constant 0 : i32
    %5 = arith.cmpi ne, %1, %c0_i32_1 : i32
    %6 = arith.extui %5 : i1 to i32
    %c0_i32_2 = arith.constant 0 : i32
    %7 = arith.cmpi ne, %6, %c0_i32_2 : i32
    scf.if %7 {
      %c0 = arith.constant 0 : index
      %c0_3 = arith.constant 0 : index
      %c0_4 = arith.constant 0 : index
      %8 = vector.load %arg3[%c0, %c0_3, %c0_4] : memref<1x8x128xf32, #tpu.memory_space<vmem>>, vector<1x8x128xf32>
      %cst = arith.constant 1.33333337 : f32
      %9 = vector.broadcast %cst : f32 to vector<1x8x128xf32>
      %10 = arith.mulf %8, %9 : vector<1x8x128xf32>
      %c0_5 = arith.constant 0 : index
      %c0_6 = arith.constant 0 : index
      %c0_7 = arith.constant 0 : index
      %11 = vector.load %arg4[%c0_5, %c0_6, %c0_7] : memref<1x8x128xf32, #tpu.memory_space<vmem>>, vector<1x8x128xf32>
      tpu.vector_store %arg4[%c0_5, %c0_6, %c0_7], %10 {strides = array<i32>} : memref<1x8x128xf32, #tpu.memory_space<vmem>>, vector<1x8x128xf32>,
    } else {
    }
    return
  }
  func.func @transform_0(%arg0: i32, %arg1: i32, %arg2: memref<2xi32, #tpu.memory_space<smem>>) -> (i32, i32, i32) {
    %0 = arith.index_cast %arg0 : i32 to index
    %1 = memref.load %arg2[%0] : memref<2xi32, #tpu.memory_space<smem>>
    %2 = arith.muli %arg0, %1 : i32
    %3 = arith.muli %arg1, %1 : i32
    %c0_i32 = arith.constant 0 : i32
    %c0_i32_0 = arith.constant 0 : i32
    return %2, %3, %c0_i32 : i32, i32, i32
  }
  func.func @transform_1(%arg0: i32, %arg1: i32, %arg2: memref<2xi32, #tpu.memory_space<smem>>) -> (i32, i32, i32) {
    %c0_i32 = arith.constant 0 : i32
    %c0_i32_0 = arith.constant 0 : i32
    return %arg0, %arg1, %c0_i32 : i32, i32, i32
  }
}

</mosaic_0001>

<llo_original>
// kernel: tpu_custom_call.1
$region0: #{tpu_custom_call.1}
  #allocation0 [shape = 'u32[]', space=smem, size = 0x4, offset = 0x4, fixed_abs, tag = 'smem constant byte address 0x4 - core index']
  #allocation1 [shape = 'u32[72,128]{1,0:T(1,128)}', space=vmem, size = 0x9000, scoped, tag = 'internal scratch']
  #allocation2 [shape = 's32[1]{0}', space=sflag, size = 0x4, scoped, tag = 'scoped memory for tpu_custom_call.1']
  #allocation3 [shape = 'u8[512]{0}', space=smem, size = 0x200, scoped, tag = 'prefetched SMEM operand 0']
  %s0 = inlined_call_operand.hbm [shape: s32[2], index: 0, kind: input, shape index: {}]
  %s1 = inlined_call_operand.hbm [shape: f32[2,8,128], index: 1, kind: input, shape index: {}]
  %s2 = inlined_call_operand.hbm [shape: f32[2,8,128], index: 2, kind: output, shape index: {}]
  %s3 = sld [smem:[#allocation0]]
  $region49: #{tpu_custom_call.1} parent=0
    _
  %s5 = ssub.s32 1, %s3
  %s6 = scalar_select 0, %s5, %s3
  %s8 = sshll.u32 %s0, 4
  %s9 = int_to_ptr.hbm [resolvable:$true] %s8
  %11 = dma.hbm_to_smem %s9, 16, [#allocation3], [#allocation2]
  %13 = dma.done [#allocation2], 16
  %14 = sfence
  $region1: #{tpu_custom_call.1} parent=0
    #allocation4 [shape = 'u8[8192]{0}', space=vmem, size = 0x2000, scoped, tag = 'input window, operand 1']
    #allocation5 [shape = 's32[2]{0}', space=sflag, size = 0x8, scoped, tag = 'scoped memory for tpu_custom_call.1']
    #allocation6 [shape = 's32[2]{0}', space=sflag, size = 0x8, scoped, tag = 'scoped memory for tpu_custom_call.1']
    #allocation7 [shape = 'u8[8192]{0}', space=vmem, size = 0x2000, scoped, tag = 'output window, operand 0']
    %15 = vsyncpa [#allocation5], 0
    %s16 = scalar_lea.sflag [#allocation5], 1
    %17 = vsyncpa %s16, 0
    %18 = vsyncpa [#allocation6], 0
    %s19 = scalar_lea.sflag [#allocation6], 1
    %20 = vsyncpa %s19, 0
    loop: start=0, step=1, limit=4
    $region2: #{tpu_custom_call.1} parent=1 // loop_pre_header
      _
    $region3: #{tpu_custom_call.1} parent=1 // loop_header
      %s22 = sphi 0, %s26
      %p23 = scmp.ge.s32.totalorder %s22, 4
      %s29 = sphi 0, %s41
      %s30 = sphi 0, %s37
      %s31 = sphi 0, %s29
      %s32 = sphi 0, %s30
      %s33 = sphi 0, %s31
      %s34 = sphi 0, %s32
      %s52 = sphi 0, %s54
      %s55 = sphi 0, %s52
      %s56 = sphi 0, %s55
      %s72 = sphi 0, %s56
      %s80 = sphi 0, %s82
      %s83 = sphi 0, %s80
      %s84 = sphi 0, %s83
      %s100 = sphi 0, %s84
    $region4: #{tpu_custom_call.1} parent=1 // loop_header_branch
      %25 = sbr.rel (%p23) target = $region8
    $region5: #{tpu_custom_call.1} parent=1 // loop_body
      %s27 = ssub.s32 %s22, 1
      %s28 = ssub.s32 %s22, 2
      %s35 = sadd.s32 1, %s30
      %p36 = scmp.ge.s32.totalorder %s35, 1
      %s37 = scalar_select %p36, 0, %s35
      %s38 = sadd.s32 1, %s29
      %s39 = scalar_select %p36, %s38, %s29
      %p40 = scmp.ge.s32.totalorder %s39, 2
      %s41 = scalar_select %p40, 0, %s39
      %s42 = sld [smem:[#allocation3 + %s29]]
      %s43 = smul.u32 %s29, %s42
      %s44 = smul.u32 %s30, %s42
      %s45 = sld [smem:[#allocation3 + %s41]]
      %s46 = smul.u32 %s41, %s45
      %s47 = smul.u32 %s37, %s45
      %s48 = ssub.s32 %s43, %s46
      %s49 = ssub.s32 %s44, %s47
      %s50 = sor.u32 %s48, %s49
      %p51 = scmp.eq.s32.totalorder %s50, 0
      %s53 = sadd.s32 %s52, 1
      %s54 = scalar_select %p51, %s52, %s53
      %p57 = pneg %p51
      %p58 = scmp.eq.s32.totalorder %s22, 1
      %p59 = por %p57, %p58
      %p60 = scmp.ne.s32.totalorder %s52, %s55
      %p61 = scmp.eq.s32.totalorder %s22, 0
      %p62 = por %p60, %p61
      %p63 = scmp.ne.s32.totalorder %s52, %s55
      %p64 = scmp.eq.s32.totalorder %s27, 1
      %p65 = por %p63, %p64
      %p66 = scmp.ne.s32.totalorder %s55, %s56
      %p67 = scmp.eq.s32.totalorder %s27, 0
      %p68 = por %p66, %p67
      %p69 = scmp.ne.s32.totalorder %s55, %s56
      %p70 = scmp.eq.s32.totalorder %s28, 1
      %p71 = por %p69, %p70
      %p73 = scmp.ne.s32.totalorder %s56, %s72
      %p74 = scmp.eq.s32.totalorder %s28, 0
      %p75 = por %p73, %p74
      %s76 = ssub.s32 %s29, %s41
      %s77 = ssub.s32 %s30, %s37
      %s78 = sor.u32 %s76, %s77
      %p79 = scmp.eq.s32.totalorder %s78, 0
      %s81 = sadd.s32 %s80, 1
      %s82 = scalar_select %p79, %s80, %s81
      %p85 = pneg %p79
      %p86 = scmp.eq.s32.totalorder %s22, 1
      %p87 = por %p85, %p86
      %p88 = scmp.ne.s32.totalorder %s80, %s83
      %p89 = scmp.eq.s32.totalorder %s22, 0
      %p90 = por %p88, %p89
      %p91 = scmp.ne.s32.totalorder %s80, %s83
      %p92 = scmp.eq.s32.totalorder %s27, 1
      %p93 = por %p91, %p92
      %p94 = scmp.ne.s32.totalorder %s83, %s84
      %p95 = scmp.eq.s32.totalorder %s27, 0
      %p96 = por %p94, %p95
      %p97 = scmp.ne.s32.totalorder %s83, %s84
      %p98 = scmp.eq.s32.totalorder %s28, 1
      %p99 = por %p97, %p98
      %p101 = scmp.ne.s32.totalorder %s84, %s100
      %p102 = scmp.eq.s32.totalorder %s28, 0
      %p103 = por %p101, %p102
      %p104 = scmp.le.s32.totalorder 1, %s22
      %p105 = scmp.lt.s32.totalorder %s22, 3
      %p106 = pnand %p104, %p105
      %p107 = pneg %p106
      // Predicated region
      $region9: #{tpu_custom_call.1} parent=5 // pred_check
        _
      $region10: #{tpu_custom_call.1} parent=5 // pred_check_branch
        %109 = sbr.rel (%p106) target = $region12
      $region11: #{tpu_custom_call.1} parent=5 // pred_region
        %s110 = ssub.s32 %s22, 1
      $region12: #{tpu_custom_call.1} parent=5 // pred_fallthru
        _
      %p111 = scmp.lt.s32.totalorder %s22, 2
      // Predicated region
      $region13: #{tpu_custom_call.1} parent=5 // pred_check
        %p112 = pneg %p111
      $region14: #{tpu_custom_call.1} parent=5 // pred_check_branch
        %114 = sbr.rel (%p112) target = $region16
      $region15: #{tpu_custom_call.1} parent=5 // pred_region
        // Predicated region
        $region17: #{tpu_custom_call.1} parent=15 // pred_check
          %p115 = pneg %p62
        $region18: #{tpu_custom_call.1} parent=15 // pred_check_branch
          %117 = sbr.rel (%p115) target = $region20
        $region19: #{tpu_custom_call.1} parent=15 // pred_region
          %s118 = sand.u32 %s52, 1
          %s119 = scalar_lea.sflag [#allocation5], %s118
          %s120 = sand.u32 %s52, 1
          %s121 = smul.addr %s120, 8
          %s122 = scalar_lea.vmem [#allocation4], %s121
          %s123 = sld [smem:[#allocation3 + %s29]]
          %s124 = smul.u32 %s29, %s123
          %s125 = smul.u32 %s30, %s123
          %127 = vsyncadd %s119, 0
          %s128 = sadd.s32 %s125, %s124
          %s129 = smul.addr %s128, 8
          %s130 = scalar_lea.hbm %s1, %s129
          %s132 = sshll.u32 %s130, 4
          %s133 = int_to_ptr.hbm [resolvable:$true] %s132
          %s134 = sshll.u32 %s122, 4
          %s135 = int_to_ptr.vmem [resolvable:$true] %s134
          %137 = dma.hbm_to_vmem [thread:$0]  %s133, 128, %s135, %s119
        $region20: #{tpu_custom_call.1} parent=15 // pred_fallthru
          _
      $region16: #{tpu_custom_call.1} parent=5 // pred_fallthru
        _
      %p138 = scmp.le.s32.totalorder 1, %s22
      %p139 = scmp.lt.s32.totalorder %s22, 3
      %p140 = pnand %p138, %p139
      %p141 = pneg %p140
      // Predicated region
      $region21: #{tpu_custom_call.1} parent=5 // pred_check
        _
      $region22: #{tpu_custom_call.1} parent=5 // pred_check_branch
        %143 = sbr.rel (%p140) target = $region24
      $region23: #{tpu_custom_call.1} parent=5 // pred_region
        %s144 = ssub.s32 %s22, 1
        %s145 = sand.u32 %s55, 1
        %s146 = scalar_lea.sflag [#allocation5], %s145
        %s147 = sand.u32 %s55, 1
        %s148 = smul.addr %s147, 8
        %s149 = scalar_lea.vmem [#allocation4], %s148
        // Predicated region
        $region25: #{tpu_custom_call.1} parent=23 // pred_check
          %p150 = pneg %p68
        $region26: #{tpu_custom_call.1} parent=23 // pred_check_branch
          %152 = sbr.rel (%p150) target = $region28
        $region27: #{tpu_custom_call.1} parent=23 // pred_region
          %154 = dma.done %s146, 128
        $region28: #{tpu_custom_call.1} parent=23 // pred_fallthru
          _
        %s155 = sand.u32 %s55, 1
        %s156 = scalar_lea.sflag [#allocation5], %s155
        %s157 = sand.u32 %s55, 1
        %s158 = smul.addr %s157, 8
        %s159 = scalar_lea.vmem [#allocation4], %s158
        %p160 = pneg %p68
        %p161 = pneg %p65
        %p162 = pneg %p96
        %p163 = pneg %p93
        %s164 = sand.u32 %s83, 1
        %s165 = scalar_lea.sflag [#allocation6], %s164
        %s166 = sand.u32 %s83, 1
        %s167 = smul.addr %s166, 8
        %s168 = scalar_lea.vmem [#allocation7], %s167
        %s169 = sld [smem:[#allocation3 + %s31]]
        %s170 = smul.u32 %s31, %s169
        %s171 = smul.u32 %s32, %s169
        %s172 = sld [smem:[#allocation3 + %s31]]
        %p173 = scmp.eq.s32.totalorder %s172, 0
        // Predicated region
        $region29: #{tpu_custom_call.1} parent=23 // pred_check
          %p174 = pneg %p173
        $region30: #{tpu_custom_call.1} parent=23 // pred_check_branch
          %176 = sbr.rel (%p174) target = $region32
        $region31: #{tpu_custom_call.1} parent=23 // pred_region
          %177 = vst [vmem:[%s168] sm:$0xff] 0.0
        $region32: #{tpu_custom_call.1} parent=23 // pred_fallthru
          _
        %p178 = scmp.ne.s32.totalorder %s172, 0
        // Predicated region
        $region33: #{tpu_custom_call.1} parent=23 // pred_check
          %p179 = pneg %p178
        $region34: #{tpu_custom_call.1} parent=23 // pred_check_branch
          %181 = sbr.rel (%p179) target = $region36
        $region35: #{tpu_custom_call.1} parent=23 // pred_region
          %v182 = vld [vmem:[%s149] sm:$0xff]
          %v183 = vmul.f32 %v182, 1.3333334
          %184 = vst [vmem:[%s168] sm:$0xff] %v183
        $region36: #{tpu_custom_call.1} parent=23 // pred_fallthru
          _
        %s185 = sand.u32 %s83, 1
        %s186 = scalar_lea.sflag [#allocation6], %s185
        %s187 = sand.u32 %s83, 1
        %s188 = smul.addr %s187, 8
        %s189 = scalar_lea.vmem [#allocation7], %s188
        // Predicated region
        $region37: #{tpu_custom_call.1} parent=23 // pred_check
          %p190 = pneg %p93
        $region38: #{tpu_custom_call.1} parent=23 // pred_check_branch
          %192 = sbr.rel (%p190) target = $region40
        $region39: #{tpu_custom_call.1} parent=23 // pred_region
          %194 = vsyncadd %s186, 0
          %s195 = sadd.s32 %s32, %s31
          %s196 = smul.addr %s195, 8
          %s197 = scalar_lea.hbm %s2, %s196
          %s199 = sshll.u32 %s189, 4
          %s200 = int_to_ptr.vmem [resolvable:$true] %s199
          %s201 = sshll.u32 %s197, 4
          %s202 = int_to_ptr.hbm [resolvable:$true] %s201
          %204 = dma.vmem_to_hbm [thread:$0]  %s200, 128, %s202, %s186
        $region40: #{tpu_custom_call.1} parent=23 // pred_fallthru
          _
      $region24: #{tpu_custom_call.1} parent=5 // pred_fallthru
        _
      %p205 = scmp.le.s32.totalorder 2, %s22
      // Predicated region
      $region41: #{tpu_custom_call.1} parent=5 // pred_check
        %p206 = pneg %p205
      $region42: #{tpu_custom_call.1} parent=5 // pred_check_branch
        %208 = sbr.rel (%p206) target = $region44
      $region43: #{tpu_custom_call.1} parent=5 // pred_region
        %s209 = ssub.s32 %s22, 2
        // Predicated region
        $region45: #{tpu_custom_call.1} parent=43 // pred_check
          %p210 = pneg %p99
        $region46: #{tpu_custom_call.1} parent=43 // pred_check_branch
          %212 = sbr.rel (%p210) target = $region48
        $region47: #{tpu_custom_call.1} parent=43 // pred_region
          %s213 = sand.u32 %s84, 1
          %s214 = scalar_lea.sflag [#allocation6], %s213
          %s215 = sand.u32 %s84, 1
          %s216 = smul.addr %s215, 8
          %s217 = scalar_lea.vmem [#allocation7], %s216
          %219 = dma.done %s214, 128
        $region48: #{tpu_custom_call.1} parent=43 // pred_fallthru
          _
      $region44: #{tpu_custom_call.1} parent=5 // pred_fallthru
        _
    $region6: #{tpu_custom_call.1} parent=1 // loop_footer
      %s26 = sadd.s32 1, %s22
    $region7: #{tpu_custom_call.1} parent=1 // loop_footer_branch
      %21 = sbr.rel target = $region3
    $region8: #{tpu_custom_call.1} parent=1 // loop_exit
      _
    %220 = vsyncpa [#allocation5], 1
    %s221 = scalar_lea.sflag [#allocation5], 1
    %222 = vsyncpa %s221, 1
    %223 = vsyncpa [#allocation6], 1
    %s224 = scalar_lea.sflag [#allocation6], 1
    %225 = vsyncpa %s224, 1

</llo_original>
